<compile_context>
chip_gen: v5e
topology: v5e:2x2
jax: 0.10.0
libtpu: 0.0.40
codegen_flags: <defaults>
</compile_context>

<pallas_src>
import functools
import math

import numpy as np
import jax
import jax.numpy as jnp
from jax.experimental import pallas as pl
from jax.experimental.pallas import tpu as pltpu

_EPS = 1e-5  # nn.LayerNorm default eps


# ---------------------------------------------------------------------------
# In-kernel helpers
# ---------------------------------------------------------------------------
def _layer_norm(x, w, b):
    mu = jnp.mean(x, axis=-1, keepdims=True)
    var = jnp.mean(jnp.square(x - mu), axis=-1, keepdims=True)
    return (x - mu) * jax.lax.rsqrt(var + _EPS) * w + b


# ---------------------------------------------------------------------------
# Kernels
# ---------------------------------------------------------------------------
def _patch_embed_kernel(p_ref, w_ref, b_ref, pos_ref, o_ref):
    # p: (tm, P), w: (P, D), b: (1, D), pos: (tm, D) -> o: (tm, D)
    y = jnp.dot(p_ref[...], w_ref[...], preferred_element_type=jnp.float32)
    o_ref[...] = y + b_ref[...] + pos_ref[...]


def _encoder_stack_kernel(x_in_ref, ln_ref, wqkv_ref, bqkv_ref, wo_ref,
                          bo_b2_ref, w1_ref, b1_ref, w2_ref, lnf_ref,
                          out_ref, *, num_heads, t_real):
    """One grid step == one pre-norm ViT Block; activations live in out_ref."""
    l = pl.program_id(0)
    last = pl.num_programs(0) - 1

    # Load the (padded) sequence into the resident output buffer once.
    @pl.when(l == 0)
    def _init():
        out_ref[...] = x_in_ref[...]

    x3 = out_ref[...]                                 # (B, Tp, D) fp32, resident
    B, Tp, D = x3.shape
    H = num_heads
    Dh = D // H
    scale = 1.0 / math.sqrt(Dh)

    # Flatten to a lane/sublane-dense 2-D slab for all projections.
    x = x3.reshape(B * Tp, D)
    ln = ln_ref[...]                                  # (4, D): ln1_w, ln1_b, ln2_w, ln2_b
    bo_b2 = bo_b2_ref[...]                            # (2, D): attn-out bias, mlp-fc2 bias

    # ---------------- attention:  x = x + Attn(LN1(x)) ----------------
    xn = _layer_norm(x, ln[0:1, :], ln[1:2, :])
    # Fused QKV projection: one (B*Tp, D) @ (D, 3D) bf16 MXU matmul, f32 acc.
    qkv = jnp.dot(xn.astype(jnp.bfloat16), wqkv_ref[...],
                  preferred_element_type=jnp.float32) + bqkv_ref[...]
    q = (qkv[:, :D] * scale).reshape(B, Tp, D)        # fold 1/sqrt(Dh) into q
    k = qkv[:, D:2 * D].reshape(B, Tp, D)
    v = qkv[:, 2 * D:].reshape(B, Tp, D)

    # Additive bias hiding the padded key rows (t >= t_real).
    kid = jax.lax.broadcasted_iota(jnp.int32, (1, Tp), 1)
    key_bias = jnp.where(kid < t_real, 0.0, -1e30).astype(jnp.float32)

    head_outs = []
    for h in range(H):                                # static head count
        sl = slice(h * Dh, (h + 1) * Dh)
        att = jnp.einsum('bqd,bkd->bqk', q[..., sl], k[..., sl],
                         preferred_element_type=jnp.float32)
        att = att + key_bias
        att = att - jnp.max(att, axis=-1, keepdims=True)
        att = jnp.exp(att)
        att = att * pl.reciprocal(jnp.sum(att, axis=-1, keepdims=True), approx=True)
        head_outs.append(jnp.einsum('bqk,bkd->bqd', att, v[..., sl],
                                    preferred_element_type=jnp.float32))
    o = jnp.concatenate(head_outs, axis=-1).reshape(B * Tp, D)

    o = jnp.dot(o.astype(jnp.bfloat16), wo_ref[...],
                preferred_element_type=jnp.float32) + bo_b2[0:1, :]
    x = x + o

    # ---------------- MLP:  x = x + MLP(LN2(x)) ----------------
    xn2 = _layer_norm(x, ln[2:3, :], ln[3:4, :])
    h1 = jnp.dot(xn2.astype(jnp.bfloat16), w1_ref[...],
                 preferred_element_type=jnp.float32) + b1_ref[...]
    # TODO(synk): nn.GELU() is the exact erf GELU; tanh approximation used for
    # guaranteed Mosaic lowering (~1e-3 relative difference).
    h1 = jax.nn.gelu(h1, approximate=True)
    m = jnp.dot(h1.astype(jnp.bfloat16), w2_ref[...],
                preferred_element_type=jnp.float32) + bo_b2[1:2, :]
    y = (x + m).reshape(B, Tp, D)

    @pl.when(l != last)
    def _store():
        out_ref[...] = y                              # stays resident for next layer

    # Fused final LayerNorm on the last layer; single HBM writeback.
    @pl.when(l == last)
    def _final():
        lnf = lnf_ref[...]
        out_ref[...] = _layer_norm(y, lnf[0:1, :], lnf[1:2, :])


# ---------------------------------------------------------------------------
# Pallas wrappers
# ---------------------------------------------------------------------------
def _pick_row_tile(m, pref=512):
    """Largest multiple-of-8 divisor of m that is <= pref (fallback: m)."""
    if m <= pref:
        return m
    t = pref - (pref % 8)
    while t >= 8:
        if m % t == 0:
            return t
        t -= 8
    return m


def patch_embed(patches2d, w, b, pos2d):
    M, P = patches2d.shape
    D = w.shape[1]
    tm = _pick_row_tile(M)
    return pl.pallas_call(
        _patch_embed_kernel,
        out_shape=jax.ShapeDtypeStruct((M, D), jnp.float32),
        grid=(M // tm,),
        in_specs=[
            pl.BlockSpec((tm, P), lambda i: (i, 0)),   # patch rows (streamed)
            pl.BlockSpec((P, D), lambda i: (0, 0)),    # weight (resident)
            pl.BlockSpec((1, D), lambda i: (0, 0)),    # bias
            pl.BlockSpec((tm, D), lambda i: (i, 0)),   # pos rows (streamed)
        ],
        out_specs=pl.BlockSpec((tm, D), lambda i: (i, 0)),
        compiler_params=pltpu.CompilerParams(dimension_semantics=("parallel",)),
    )(patches2d, w, b, pos2d)


def encoder_stack(seq, params, *, num_heads, t_real):
    """All transformer blocks + final LayerNorm in a single pallas_call."""
    B, Tp, D = seq.shape
    L = params['wqkv'].shape[0]
    Hd = params['w1'].shape[-1]

    # Explicit VMEM budget: double-buffered bf16 weights + f32 activations.
    weight_bytes = 2 * (D * 3 * D + D * D + D * Hd + Hd * D)   # bf16 per layer
    small_bytes = 4 * (4 * D + 3 * D + 2 * D + Hd + 2 * D)
    act_bytes = 4 * B * Tp * D * 2                              # seq + out resident
    vmem_limit = int(2.5 * (weight_bytes + small_bytes)) + act_bytes + (8 << 20)
    vmem_limit = min(max(vmem_limit, 32 << 20), 64 << 20)

    grid_spec = pltpu.PrefetchScalarGridSpec(
        num_scalar_prefetch=0,
        grid=(L,),
        in_specs=[
            pl.BlockSpec((B, Tp, D), lambda l: (0, 0, 0)),          # seq (loaded once)
            pl.BlockSpec((None, 4, D), lambda l: (l, 0, 0)),        # LN1/LN2 params
            pl.BlockSpec((None, D, 3 * D), lambda l: (l, 0, 0)),    # fused QKV weight (bf16)
            pl.BlockSpec((None, 1, 3 * D), lambda l: (l, 0, 0)),    # fused QKV bias
            pl.BlockSpec((None, D, D), lambda l: (l, 0, 0)),        # attn out proj (bf16)
            pl.BlockSpec((None, 2, D), lambda l: (l, 0, 0)),        # [attn-out bias, fc2 bias]
            pl.BlockSpec((None, D, Hd), lambda l: (l, 0, 0)),       # mlp fc1 weight (bf16)
            pl.BlockSpec((None, 1, Hd), lambda l: (l, 0, 0)),       # mlp fc1 bias
            pl.BlockSpec((None, Hd, D), lambda l: (l, 0, 0)),       # mlp fc2 weight (bf16)
            pl.BlockSpec((2, D), lambda l: (0, 0)),                 # final LN params
        ],
        out_specs=pl.BlockSpec((B, Tp, D), lambda l: (0, 0, 0)),    # resident activations
    )
    return pl.pallas_call(
        functools.partial(_encoder_stack_kernel, num_heads=num_heads, t_real=t_real),
        out_shape=jax.ShapeDtypeStruct((B, Tp, D), jnp.float32),
        grid_spec=grid_spec,
        compiler_params=pltpu.CompilerParams(
            dimension_semantics=("arbitrary",),
            vmem_limit_bytes=vmem_limit),
    )(seq, params['ln'], params['wqkv'], params['bqkv'], params['wo'],
      params['bo_b2'], params['w1'], params['b1'], params['w2'], params['ln_f'])


# ---------------------------------------------------------------------------
# Parameter init (deterministic, synthetic) — per-layer weights stacked on a
# leading layer axis so the stack kernel can stream them (big weights in bf16).
# ---------------------------------------------------------------------------
def init_params(key, num_channels, patch_size, emb_dim, num_layer, num_head,
                num_patches):
    del num_head
    P = num_channels * patch_size * patch_size
    hidden = 4 * emb_dim  # timm Block default mlp_ratio = 4
    keys = iter(jax.random.split(key, 10))

    def nrm(k, shape, std):
        return (jax.random.normal(k, shape, jnp.float32) * std).astype(jnp.float32)

    ln_single = jnp.stack([jnp.ones((emb_dim,), jnp.float32),
                           jnp.zeros((emb_dim,), jnp.float32),
                           jnp.ones((emb_dim,), jnp.float32),
                           jnp.zeros((emb_dim,), jnp.float32)], axis=0)  # (4, D)

    params = {
        'cls': nrm(next(keys), (1, 1, emb_dim), 0.02),           # trunc_normal(std=0.02)
        'pos': nrm(next(keys), (num_patches, emb_dim), 0.02),    # trunc_normal(std=0.02)
        'patch_w': nrm(next(keys), (P, emb_dim), 1.0 / math.sqrt(P)),
        'patch_b': nrm(next(keys), (1, emb_dim), 1.0 / math.sqrt(P)),
        'ln_f': jnp.concatenate([jnp.ones((1, emb_dim), jnp.float32),
                                 jnp.zeros((1, emb_dim), jnp.float32)], axis=0),
        'ln': jnp.tile(ln_single[None], (num_layer, 1, 1)),                     # (L,4,D)
        'wqkv': nrm(next(keys), (num_layer, emb_dim, 3 * emb_dim),
                    1.0 / math.sqrt(emb_dim)).astype(jnp.bfloat16),
        'bqkv': nrm(next(keys), (num_layer, 1, 3 * emb_dim), 0.02),
        'wo': nrm(next(keys), (num_layer, emb_dim, emb_dim),
                  1.0 / math.sqrt(emb_dim)).astype(jnp.bfloat16),
        'bo_b2': jnp.zeros((num_layer, 2, emb_dim), jnp.float32),
        'w1': nrm(next(keys), (num_layer, emb_dim, hidden),
                  1.0 / math.sqrt(emb_dim)).astype(jnp.bfloat16),
        'b1': jnp.zeros((num_layer, 1, hidden), jnp.float32),
        'w2': nrm(next(keys), (num_layer, hidden, emb_dim),
                  1.0 / math.sqrt(hidden)).astype(jnp.bfloat16),
    }
    return params


# ---------------------------------------------------------------------------
# Full encoder forward
# ---------------------------------------------------------------------------
def mae_encoder_forward(img, params, *, patch_size, num_heads, mask_ratio,
                        np_rng):
    B, C, Himg, Wimg = img.shape
    p = patch_size
    Hp, Wp = Himg // p, Wimg // p
    N = Hp * Wp
    D = params['pos'].shape[-1]
    Pdim = C * p * p

    # Patch extraction (glue): NCHW -> (B, N, C*p*p), inner order (c, i, j)
    # matching nn.Conv2d's flattened weight so patchify becomes a matmul.
    x = img.reshape(B, C, Hp, p, Wp, p)
    x = jnp.transpose(x, (0, 2, 4, 1, 3, 5))
    patches = x.reshape(B, N, Pdim).astype(jnp.float32)

    # PatchShuffle: host-side numpy permutation (same as the PyTorch reference).
    num_remaining = int(N * (1.0 - mask_ratio))
    fwd_idx, bwd_idx = [], []
    for _ in range(B):
        f = np.arange(N)
        np_rng.shuffle(f)
        fwd_idx.append(f)
        bwd_idx.append(np.argsort(f))
    forward_indexes = jnp.asarray(np.stack(fwd_idx, axis=0), dtype=jnp.int32)
    backward_indexes = jnp.asarray(np.stack(bwd_idx, axis=0), dtype=jnp.int32)

    # Select the KEPT patches before embedding (saves mask_ratio of the work)
    # and gather the matching pos-embedding rows -> identical semantics to
    # "embed all + add pos + shuffle + keep first Nk".
    keep = forward_indexes[:, :num_remaining]                               # (B, Nk)
    patches_kept = jnp.take_along_axis(patches, keep[..., None], axis=1)    # (B,Nk,P)
    pos_kept = jnp.take(params['pos'], keep, axis=0)                        # (B,Nk,D)

    Nk = num_remaining
    emb = patch_embed(patches_kept.reshape(B * Nk, Pdim),
                      params['patch_w'], params['patch_b'],
                      pos_kept.reshape(B * Nk, D)).reshape(B, Nk, D)

    # Prepend cls token, then pad the sequence to a sublane multiple (8).
    cls = jnp.broadcast_to(params['cls'], (B, 1, D))
    seq = jnp.concatenate([cls, emb], axis=1)                               # (B, T, D)
    T_real = Nk + 1
    Tp = ((T_real + 7) // 8) * 8
    seq_p = jnp.pad(seq, ((0, 0), (0, Tp - T_real), (0, 0)))

    # Fused transformer stack + final LayerNorm (single Pallas kernel); drop
    # the padded rows afterwards (padded keys were masked inside the kernel).
    feats_p = encoder_stack(seq_p, params, num_heads=num_heads, t_real=T_real)
    return feats_p[:, :T_real, :], backward_indexes


# ---------------------------------------------------------------------------
if __name__ == "__main__":
    # Small, self-consistent configuration.
    image_size = 16
    num_channels = 4
    patch_size = 4
    emb_dim = 32
    num_layer = 2
    num_head = 4
    mask_ratio = 0.75
    batch = 2
    num_patches = (image_size // patch_size) ** 2   # 16

    key = jax.random.PRNGKey(0)
    k_img, k_params = jax.random.split(key)
    img = jax.random.normal(k_img, (batch, num_channels, image_size, image_size),
                            jnp.float32)

    params = init_params(k_params, num_channels, patch_size, emb_dim,
                         num_layer, num_head, num_patches)

    np_rng = np.random.RandomState(0)  # deterministic host-side shuffle
    features, backward_indexes = mae_encoder_forward(
        img, params, patch_size=patch_size, num_heads=num_head,
        mask_ratio=mask_ratio, np_rng=np_rng)

    features = jax.block_until_ready(features)
    backward_indexes = jax.block_until_ready(backward_indexes)

    expected_seq = 1 + int(num_patches * (1.0 - mask_ratio))
    assert features.shape == (batch, expected_seq, emb_dim), features.shape
    assert backward_indexes.shape == (batch, num_patches), backward_indexes.shape
    assert bool(jnp.all(jnp.isfinite(features)))

    print("KERNEL_OK")
</pallas_src>

<mosaic_0001>
module attributes {stable_mosaic.version = 11 : i64} {
  func.func @_patch_embed_kernel(%arg0: i32, %arg1: memref<8x64xf32, #tpu.memory_space<vmem>>, %arg2: memref<64x32xf32, #tpu.memory_space<vmem>>, %arg3: memref<1x32xf32, #tpu.memory_space<vmem>>, %arg4: memref<8x32xf32, #tpu.memory_space<vmem>>, %arg5: memref<8x32xf32, #tpu.memory_space<vmem>>) attributes {dimension_semantics = [#tpu.dimension_semantics<parallel>], iteration_bounds = array<i64: 1>, scalar_prefetch = 0 : i64, scratch_operands = 0 : i64, tpu.core_type = #tpu.core_type<tc>, window_params = [{transform_indices = @transform_0, window_bounds = array<i64: 8, 64>}, {pipeline_mode = #tpu.pipeline_mode<synchronous>, transform_indices = @transform_1, window_bounds = array<i64: 64, 32>}, {pipeline_mode = #tpu.pipeline_mode<synchronous>, transform_indices = @transform_2, window_bounds = array<i64: 1, 32>}, {transform_indices = @transform_3, window_bounds = array<i64: 8, 32>}, {transform_indices = @transform_4, window_bounds = array<i64: 8, 32>}]} {
    %c0 = arith.constant 0 : index
    %c0_0 = arith.constant 0 : index
    %0 = vector.load %arg1[%c0, %c0_0] : memref<8x64xf32, #tpu.memory_space<vmem>>, vector<8x64xf32>
    %c0_1 = arith.constant 0 : index
    %c0_2 = arith.constant 0 : index
    %1 = vector.load %arg2[%c0_1, %c0_2] : memref<64x32xf32, #tpu.memory_space<vmem>>, vector<64x32xf32>
    %cst = arith.constant dense<0.000000e+00> : vector<8x32xf32>
    %2 = tpu.matmul %0, %1, %cst {dimension_numbers = #tpu.dot_dimension_numbers<[1], [0], [0], [1], [0, 0, 1, 1], [], []>} : vector<8x64xf32>, vector<64x32xf32>, vector<8x32xf32> -> vector<8x32xf32>
    %c0_3 = arith.constant 0 : index
    %c0_4 = arith.constant 0 : index
    %3 = vector.load %arg3[%c0_3, %c0_4] : memref<1x32xf32, #tpu.memory_space<vmem>>, vector<1x32xf32>
    %4 = vector.broadcast %3 : vector<1x32xf32> to vector<8x32xf32>
    %5 = arith.addf %2, %4 : vector<8x32xf32>
    %c0_5 = arith.constant 0 : index
    %c0_6 = arith.constant 0 : index
    %6 = vector.load %arg4[%c0_5, %c0_6] : memref<8x32xf32, #tpu.memory_space<vmem>>, vector<8x32xf32>
    %7 = arith.addf %5, %6 : vector<8x32xf32>
    %c0_7 = arith.constant 0 : index
    %c0_8 = arith.constant 0 : index
    %8 = vector.load %arg5[%c0_7, %c0_8] : memref<8x32xf32, #tpu.memory_space<vmem>>, vector<8x32xf32>
    tpu.vector_store %arg5[%c0_7, %c0_8], %7 {strides = array<i32>} : memref<8x32xf32, #tpu.memory_space<vmem>>, vector<8x32xf32>,
    return
  }
  func.func @transform_0(%arg0: i32) -> (i32, i32) {
    %c0_i32 = arith.constant 0 : i32
    %c0_i32_0 = arith.constant 0 : i32
    return %arg0, %c0_i32 : i32, i32
  }
  func.func @transform_1(%arg0: i32) -> (i32, i32) {
    %c0_i32 = arith.constant 0 : i32
    %c0_i32_0 = arith.constant 0 : i32
    %c0_i32_1 = arith.constant 0 : i32
    return %c0_i32, %c0_i32_0 : i32, i32
  }
  func.func @transform_2(%arg0: i32) -> (i32, i32) {
    %c0_i32 = arith.constant 0 : i32
    %c0_i32_0 = arith.constant 0 : i32
    %c0_i32_1 = arith.constant 0 : i32
    return %c0_i32, %c0_i32_0 : i32, i32
  }
  func.func @transform_3(%arg0: i32) -> (i32, i32) {
    %c0_i32 = arith.constant 0 : i32
    %c0_i32_0 = arith.constant 0 : i32
    return %arg0, %c0_i32 : i32, i32
  }
  func.func @transform_4(%arg0: i32) -> (i32, i32) {
    %c0_i32 = arith.constant 0 : i32
    %c0_i32_0 = arith.constant 0 : i32
    return %arg0, %c0_i32 : i32, i32
  }
}

</mosaic_0001>

<llo_original>
// kernel: tpu_custom_call.1
$region0: #{tpu_custom_call.1}
  #allocation0 [shape = 'u32[]', space=smem, size = 0x4, offset = 0x4, fixed_abs, tag = 'smem constant byte address 0x4 - core index']
  #allocation1 [shape = 'u32[72,128]{1,0:T(1,128)}', space=vmem, size = 0x9000, scoped, tag = 'internal scratch']
  %s0 = inlined_call_operand.vmem [shape: f32[8,64], index: 0, kind: input, shape index: {}]
  %s1 = inlined_call_operand.vmem [shape: f32[64,32], index: 1, kind: input, shape index: {}]
  %s2 = inlined_call_operand.vmem [shape: f32[1,32], index: 2, kind: input, shape index: {}]
  %s3 = inlined_call_operand.vmem [shape: f32[8,32], index: 3, kind: input, shape index: {}]
  %s4 = inlined_call_operand.hbm [shape: f32[8,32], index: 4, kind: output, shape index: {}]
  %s5 = sld [smem:[#allocation0]]
  $region26: #{tpu_custom_call.1} parent=0
    _
  %s7 = ssub.s32 1, %s5
  %s8 = scalar_select 0, %s7, %s5
  $region1: #{tpu_custom_call.1} parent=0
    #allocation2 [shape = 'u8[4096]{0}', space=vmem, size = 0x1000, scoped, tag = 'output window, operand 0, single buffered']
    #allocation3 [shape = 's32[1]{0}', space=sflag, size = 0x4, scoped, tag = 'scoped memory for tpu_custom_call.1']
    %9 = vsyncpa [#allocation3], 0
    // Predicated region
    $region2: #{tpu_custom_call.1} parent=1 // pred_check
      _
    $region3: #{tpu_custom_call.1} parent=1 // pred_check_branch
      %11 = sbr.rel (0) target = $region5
    $region4: #{tpu_custom_call.1} parent=1 // pred_region
      _
    $region5: #{tpu_custom_call.1} parent=1 // pred_fallthru
      _
    // Predicated region
    $region6: #{tpu_custom_call.1} parent=1 // pred_check
      _
    $region7: #{tpu_custom_call.1} parent=1 // pred_check_branch
      %13 = sbr.rel (0) target = $region9
    $region8: #{tpu_custom_call.1} parent=1 // pred_region
      _
    $region9: #{tpu_custom_call.1} parent=1 // pred_fallthru
      _
    // Predicated region
    $region10: #{tpu_custom_call.1} parent=1 // pred_check
      _
    $region11: #{tpu_custom_call.1} parent=1 // pred_check_branch
      %15 = sbr.rel (0) target = $region13
    $region12: #{tpu_custom_call.1} parent=1 // pred_region
      _
    $region13: #{tpu_custom_call.1} parent=1 // pred_fallthru
      _
    // Predicated region
    $region14: #{tpu_custom_call.1} parent=1 // pred_check
      _
    $region15: #{tpu_custom_call.1} parent=1 // pred_check_branch
      %17 = sbr.rel (0) target = $region17
    $region16: #{tpu_custom_call.1} parent=1 // pred_region
      _
    $region17: #{tpu_custom_call.1} parent=1 // pred_fallthru
      _
    %v18 = vld [vmem:[%s0] sm:$0xff]
    %v19 = vld [vmem:[%s1] sm:$0xff]
    %v20 = vld [vmem:[%s1 + $0x8] sm:$0xff]
    %v21 = vld [vmem:[%s1 + $0x10] sm:$0xff]
    %v22 = vld [vmem:[%s1 + $0x18] sm:$0xff]
    %v23 = vld [vmem:[%s1 + $0x20] sm:$0xff]
    %v24 = vld [vmem:[%s1 + $0x28] sm:$0xff]
    %v25 = vld [vmem:[%s1 + $0x30] sm:$0xff]
    %v26 = vld [vmem:[%s1 + $0x38] sm:$0xff]
    %v27 = vld [vmem:[%s2] sm:$0x1]
    %v29 = vperm.slane %v27, 0
    %vm31 = vcmask 523264
    %v33 = vsel %vm31, %v18, 0
    %35 = vmatpush.msra.mxu0 0.0
    %36 = vmatpush.msra.mxu0 0.0
    %37 = vmatpush.msra.mxu0 0.0
    %38 = vmatpush.msra.mxu0 0.0
    %39 = vmatpush.msra.mxu0 0.0
    %40 = vmatpush.msra.mxu0 0.0
    %41 = vmatpush.msra.mxu0 0.0
    %42 = vmatpush.msra.mxu0 0.0
    %43 = vmatpush.msra.mxu0 %v26
    %44 = vmatpush.msra.mxu0 %v25
    %45 = vmatpush.msra.mxu0 %v24
    %46 = vmatpush.msra.mxu0 %v23
    %47 = vmatpush.msra.mxu0 %v22
    %48 = vmatpush.msra.mxu0 %v21
    %49 = vmatpush.msra.mxu0 %v20
    %50 = vmatpush.msra.mxu0 %v19
    %51 = vmatmul.f32.gmra.mxu0 %v33
    %v52 = vpop.f32.mrf.mxu0
    %v53 = vadd.f32 %v29, %v52
    %54 = vdwg.mxu0
    %v55 = vld [vmem:[%s3] sm:$0xff]
    %v56 = vadd.f32 %v53, %v55
    %vm57 = vcmask 261120
    %58 = vst.msk [vmem:[#allocation2] sm:$0xff] %vm57, %v56
    // Predicated region
    $region18: #{tpu_custom_call.1} parent=1 // pred_check
      _
    $region19: #{tpu_custom_call.1} parent=1 // pred_check_branch
      %60 = sbr.rel (0) target = $region21
    $region20: #{tpu_custom_call.1} parent=1 // pred_region
      %62 = vsyncadd [#allocation3], 0
      %s64 = sshll.u32 [#allocation2], 4
      %s65 = int_to_ptr.vmem [resolvable:$true] %s64
      %s66 = sshll.u32 %s4, 4
      %s67 = int_to_ptr.hbm [resolvable:$true] %s66
      %69 = dma.vmem_to_hbm [thread:$0]  %s65, 128, %s67, [#allocation3]
    $region21: #{tpu_custom_call.1} parent=1 // pred_fallthru
      _
    // Predicated region
    $region22: #{tpu_custom_call.1} parent=1 // pred_check
      _
    $region23: #{tpu_custom_call.1} parent=1 // pred_check_branch
      %71 = sbr.rel (0) target = $region25
    $region24: #{tpu_custom_call.1} parent=1 // pred_region
      %73 = dma.done [#allocation3], 128
    $region25: #{tpu_custom_call.1} parent=1 // pred_fallthru
      _
    %74 = vsyncpa [#allocation3], 1

</llo_original>
